<compile_context>
chip_gen: v7x
topology: tpu7x:2x2x1
jax: 0.10.0
libtpu: 0.0.40
codegen_flags: <defaults>
</compile_context>

<pallas_src>
import jax
import jax.numpy as jnp
from jax.experimental import pallas as pl
from jax.experimental.pallas import tpu as pltpu


def _llama_mlp_kernel(x_ref, wgu_ref, wd_ref, o_ref, acc_ref):
    """One (tm, H) output tile, accumulated over the intermediate (I) axis.

    x_ref:   (tm, H)     bf16 activation tile
    wgu_ref: (H, 2*ti)   bf16 fused [gate_k | up_k] weight tile
    wd_ref:  (ti, H)     bf16 down-projection weight tile
    o_ref:   (tm, H)     output tile (written on the last reduction step)
    acc_ref: (tm, H)     f32 accumulator (VMEM scratch, persists across k)
    """
    k = pl.program_id(1)

    @pl.when(k == 0)
    def _init():
        acc_ref[...] = jnp.zeros_like(acc_ref)

    ti = wd_ref.shape[0]
    # One MXU pass over x for gate+up (fused weight), f32 accumulation.
    gu = jnp.dot(x_ref[...], wgu_ref[...], preferred_element_type=jnp.float32)
    g = gu[:, :ti]
    u = gu[:, ti:]
    # SiLU gating in f32 — VPU/EUP work hides under the MXU at real shapes.
    h = (g * jax.nn.sigmoid(g)) * u
    acc_ref[...] += jnp.dot(
        h.astype(wd_ref.dtype), wd_ref[...], preferred_element_type=jnp.float32
    )

    @pl.when(k == pl.num_programs(1) - 1)
    def _finalize():
        o_ref[...] = acc_ref[...].astype(o_ref.dtype)


def _pick_i_tile(I, desired):
    """Largest tile <= desired that divides I, preferring multiples of 128."""
    t = min(desired, I)
    if I % t == 0:
        return t
    t -= t % 128
    while t >= 128:
        if I % t == 0:
            return t
        t -= 128
    return I


def llama_mlp(x, w_gate, w_up, w_down, *, tm=256, ti=512):
    """SwiGLU MLP: (silu(x @ w_gate) * (x @ w_up)) @ w_down via Pallas.

    x: (B, S, H) float32. w_gate/w_up: (H, I). w_down: (I, H).
    Matmuls run in bf16 on the MXU with f32 accumulation; output keeps x.dtype.
    """
    B, S, H = x.shape
    I = w_gate.shape[1]
    M = B * S

    ti = _pick_i_tile(I, ti)
    n_i = I // ti

    x2d = x.reshape(M, H)
    if M <= tm:
        tm = M
        M_pad = M
    else:
        M_pad = pl.cdiv(M, tm) * tm
        if M_pad != M:
            x2d = jnp.pad(x2d, ((0, M_pad - M), (0, 0)))
    n_m = M_pad // tm

    # bf16 operands for the MXU; accumulation stays f32 inside the kernel.
    compute_dtype = jnp.bfloat16
    x2d = x2d.astype(compute_dtype)
    # Fuse gate and up into one (H, 2*I) weight, interleaved per I-tile so a
    # contiguous (H, 2*ti) column block holds [gate_k | up_k].
    w_gu = jnp.concatenate(
        [
            w_gate.astype(compute_dtype).reshape(H, n_i, ti),
            w_up.astype(compute_dtype).reshape(H, n_i, ti),
        ],
        axis=2,
    ).reshape(H, 2 * I)
    w_d = w_down.astype(compute_dtype)

    # VMEM budget: double-buffered bf16 input tiles + output + f32 accumulator.
    tile_bytes = 2 * 2 * (tm * H + H * 2 * ti + ti * H)   # 2 bufs x bf16 inputs
    tile_bytes += 2 * tm * H * x.dtype.itemsize           # output, 2 bufs
    tile_bytes += tm * H * 4                               # f32 accumulator
    vmem_limit = int(min(max(tile_bytes * 2, 32 << 20), 100 << 20))

    out2d = pl.pallas_call(
        _llama_mlp_kernel,
        out_shape=jax.ShapeDtypeStruct((M_pad, H), x.dtype),
        grid_spec=pltpu.PrefetchScalarGridSpec(
            num_scalar_prefetch=0,
            grid=(n_m, n_i),  # reduction (I) axis last
            in_specs=[
                pl.BlockSpec((tm, H), lambda i, k: (i, 0)),
                pl.BlockSpec((H, 2 * ti), lambda i, k: (0, k)),
                pl.BlockSpec((ti, H), lambda i, k: (k, 0)),
            ],
            out_specs=pl.BlockSpec((tm, H), lambda i, k: (i, 0)),
            scratch_shapes=[pltpu.VMEM((tm, H), jnp.float32)],
        ),
        compiler_params=pltpu.CompilerParams(
            dimension_semantics=("parallel", "arbitrary"),
            vmem_limit_bytes=vmem_limit,
        ),
    )(x2d, w_gu, w_d)

    if M_pad != M:
        out2d = out2d[:M]
    return out2d.reshape(B, S, H)


def reference_mlp(x, w_gate, w_up, w_down):
    """Pure-JAX reference mirroring the kernel's bf16-operand / f32-acc numerics."""
    f32 = jnp.float32
    xb = x.astype(jnp.bfloat16).astype(f32)
    wg = w_gate.astype(jnp.bfloat16).astype(f32)
    wu = w_up.astype(jnp.bfloat16).astype(f32)
    wd = w_down.astype(jnp.bfloat16).astype(f32)
    gate = jnp.einsum("bsh,hi->bsi", xb, wg)
    up = jnp.einsum("bsh,hi->bsi", xb, wu)
    h = gate * jax.nn.sigmoid(gate) * up
    hb = h.astype(jnp.bfloat16).astype(f32)
    return jnp.einsum("bsi,ih->bsh", hb, wd)


if __name__ == "__main__":
    # Small LlamaMLP config: hidden_size=32, intermediate_size=64, act='silu'.
    # TODO(synk): demo shapes are toy-sized (lane dim < 128); tune tiles only
    # at production shapes (H=4096, I=11008+).
    B, S, H, I = 2, 8, 32, 64

    key = jax.random.PRNGKey(0)
    kx, kg, ku, kd = jax.random.split(key, 4)

    x = jax.random.normal(kx, (B, S, H), dtype=jnp.float32)
    # torch Linear stores (out, in); we keep the transposed (in, out) layout
    # so every kernel matmul is a plain x @ W.
    w_gate = jax.random.normal(kg, (H, I), dtype=jnp.float32) * (1.0 / H**0.5)
    w_up = jax.random.normal(ku, (H, I), dtype=jnp.float32) * (1.0 / H**0.5)
    w_down = jax.random.normal(kd, (I, H), dtype=jnp.float32) * (1.0 / I**0.5)

    out = llama_mlp(x, w_gate, w_up, w_down)
    out = jax.block_until_ready(out)

    ref = reference_mlp(x, w_gate, w_up, w_down)
    assert out.shape == (B, S, H)
    assert jnp.allclose(out, ref, atol=2e-2, rtol=2e-2), "mismatch vs reference"

    print("KERNEL_OK")
</pallas_src>

<mosaic_0001>
module attributes {stable_mosaic.version = 11 : i64} {
  func.func @_llama_mlp_kernel(%arg0: i32, %arg1: i32, %arg2: memref<16x32xbf16, #tpu.memory_space<vmem>>, %arg3: memref<32x128xbf16, #tpu.memory_space<vmem>>, %arg4: memref<64x32xbf16, #tpu.memory_space<vmem>>, %arg5: memref<16x32xf32, #tpu.memory_space<vmem>>, %arg6: memref<16x32xf32, #tpu.memory_space<vmem>>) attributes {dimension_semantics = [#tpu.dimension_semantics<parallel>, #tpu.dimension_semantics<arbitrary>], iteration_bounds = array<i64: 1, 1>, scalar_prefetch = 0 : i64, scratch_operands = 1 : i64, tpu.core_type = #tpu.core_type<tc>, window_params = [{transform_indices = @transform_0, window_bounds = array<i64: 16, 32>}, {transform_indices = @transform_1, window_bounds = array<i64: 32, 128>}, {transform_indices = @transform_2, window_bounds = array<i64: 64, 32>}, {transform_indices = @transform_3, window_bounds = array<i64: 16, 32>}]} {
    %c0_i32 = arith.constant 0 : i32
    %0 = arith.cmpi eq, %arg1, %c0_i32 : i32
    %1 = arith.extui %0 : i1 to i32
    %c0_i32_0 = arith.constant 0 : i32
    %2 = arith.cmpi ne, %1, %c0_i32_0 : i32
    scf.if %2 {
      %cst_14 = arith.constant 0.000000e+00 : f32
      %24 = vector.broadcast %cst_14 : f32 to vector<16x32xf32>
      %c0_15 = arith.constant 0 : index
      %c0_16 = arith.constant 0 : index
      %25 = vector.load %arg6[%c0_15, %c0_16] : memref<16x32xf32, #tpu.memory_space<vmem>>, vector<16x32xf32>
      tpu.vector_store %arg6[%c0_15, %c0_16], %24 {strides = array<i32>} : memref<16x32xf32, #tpu.memory_space<vmem>>, vector<16x32xf32>,
    } else {
    }
    %c0 = arith.constant 0 : index
    %c0_1 = arith.constant 0 : index
    %3 = vector.load %arg2[%c0, %c0_1] : memref<16x32xbf16, #tpu.memory_space<vmem>>, vector<16x32xbf16>
    %c0_2 = arith.constant 0 : index
    %c0_3 = arith.constant 0 : index
    %4 = vector.load %arg3[%c0_2, %c0_3] : memref<32x128xbf16, #tpu.memory_space<vmem>>, vector<32x128xbf16>
    %cst = arith.constant dense<0.000000e+00> : vector<16x128xf32>
    %5 = tpu.matmul %3, %4, %cst {dimension_numbers = #tpu.dot_dimension_numbers<[1], [0], [0], [1], [0, 0, 1, 1], [], []>} : vector<16x32xbf16>, vector<32x128xbf16>, vector<16x128xf32> -> vector<16x128xf32>
    %6 = vector.extract_strided_slice %5 {offsets = [0, 0], sizes = [16, 64], strides = [1, 1]} : vector<16x128xf32> to vector<16x64xf32>
    %7 = vector.extract_strided_slice %5 {offsets = [0, 64], sizes = [16, 64], strides = [1, 1]} : vector<16x128xf32> to vector<16x64xf32>
    %8 = arith.negf %6 : vector<16x64xf32>
    %9 = math.exp %8 : vector<16x64xf32>
    %cst_4 = arith.constant 1.000000e+00 : f32
    %10 = vector.broadcast %cst_4 : f32 to vector<16x64xf32>
    %11 = arith.addf %10, %9 : vector<16x64xf32>
    %12 = arith.divf %10, %11 : vector<16x64xf32>
    %13 = arith.mulf %6, %12 : vector<16x64xf32>
    %14 = arith.mulf %13, %7 : vector<16x64xf32>
    %c0_5 = arith.constant 0 : index
    %c0_6 = arith.constant 0 : index
    %15 = vector.load %arg6[%c0_5, %c0_6] : memref<16x32xf32, #tpu.memory_space<vmem>>, vector<16x32xf32>
    %16 = arith.truncf %14 : vector<16x64xf32> to vector<16x64xbf16>
    %c0_7 = arith.constant 0 : index
    %c0_8 = arith.constant 0 : index
    %17 = vector.load %arg4[%c0_7, %c0_8] : memref<64x32xbf16, #tpu.memory_space<vmem>>, vector<64x32xbf16>
    %cst_9 = arith.constant dense<0.000000e+00> : vector<16x32xf32>
    %18 = tpu.matmul %16, %17, %cst_9 {dimension_numbers = #tpu.dot_dimension_numbers<[1], [0], [0], [1], [0, 0, 1, 1], [], []>} : vector<16x64xbf16>, vector<64x32xbf16>, vector<16x32xf32> -> vector<16x32xf32>
    %19 = arith.addf %15, %18 : vector<16x32xf32>
    %c0_10 = arith.constant 0 : index
    %c0_11 = arith.constant 0 : index
    %20 = vector.load %arg6[%c0_10, %c0_11] : memref<16x32xf32, #tpu.memory_space<vmem>>, vector<16x32xf32>
    tpu.vector_store %arg6[%c0_10, %c0_11], %19 {strides = array<i32>} : memref<16x32xf32, #tpu.memory_space<vmem>>, vector<16x32xf32>,
    %c0_i32_12 = arith.constant 0 : i32
    %21 = arith.cmpi eq, %arg1, %c0_i32_12 : i32
    %22 = arith.extui %21 : i1 to i32
    %c0_i32_13 = arith.constant 0 : i32
    %23 = arith.cmpi ne, %22, %c0_i32_13 : i32
    scf.if %23 {
      %c0_14 = arith.constant 0 : index
      %c0_15 = arith.constant 0 : index
      %24 = vector.load %arg6[%c0_14, %c0_15] : memref<16x32xf32, #tpu.memory_space<vmem>>, vector<16x32xf32>
      %c0_16 = arith.constant 0 : index
      %c0_17 = arith.constant 0 : index
      %25 = vector.load %arg5[%c0_16, %c0_17] : memref<16x32xf32, #tpu.memory_space<vmem>>, vector<16x32xf32>
      tpu.vector_store %arg5[%c0_16, %c0_17], %24 {strides = array<i32>} : memref<16x32xf32, #tpu.memory_space<vmem>>, vector<16x32xf32>,
    } else {
    }
    return
  }
  func.func @transform_0(%arg0: i32, %arg1: i32) -> (i32, i32) {
    %c0_i32 = arith.constant 0 : i32
    %c0_i32_0 = arith.constant 0 : i32
    return %arg0, %c0_i32 : i32, i32
  }
  func.func @transform_1(%arg0: i32, %arg1: i32) -> (i32, i32) {
    %c0_i32 = arith.constant 0 : i32
    %c0_i32_0 = arith.constant 0 : i32
    return %c0_i32, %arg1 : i32, i32
  }
  func.func @transform_2(%arg0: i32, %arg1: i32) -> (i32, i32) {
    %c0_i32 = arith.constant 0 : i32
    %c0_i32_0 = arith.constant 0 : i32
    return %arg1, %c0_i32 : i32, i32
  }
  func.func @transform_3(%arg0: i32, %arg1: i32) -> (i32, i32) {
    %c0_i32 = arith.constant 0 : i32
    %c0_i32_0 = arith.constant 0 : i32
    return %arg0, %c0_i32 : i32, i32
  }
}

</mosaic_0001>

<llo_original>
// kernel: tpu_custom_call.1
$region0: #{tpu_custom_call.1}
  #allocation0 [shape = 'u32[]', space=smem, size = 0x4, offset = 0x4, fixed_abs, tag = 'smem constant byte address 0x4 - core index']
  #allocation1 [shape = 'u32[144,128]{1,0:T(1,128)}', space=vmem, size = 0x12000, scoped, tag = 'internal scratch']
  #allocation2 [shape = 'f32[16,32]{1,0:T(8,128)}', space=vmem, size = 0x2000, scoped, tag = 'scratch operand']
  %s0 = inlined_call_operand.vmem [shape: bf16[16,32], index: 0, kind: input, shape index: {}]
  %s1 = inlined_call_operand.vmem [shape: bf16[32,128], index: 1, kind: input, shape index: {}]
  %s2 = inlined_call_operand.vmem [shape: bf16[64,32], index: 2, kind: input, shape index: {}]
  %s3 = inlined_call_operand.hbm [shape: f32[16,32], index: 3, kind: output, shape index: {}]
  %s4 = sld [smem:[#allocation0]]
  $region30: #{tpu_custom_call.1} parent=0
    _
  %s6 = ssub.s32 1, %s4
  %s7 = scalar_select 0, %s6, %s4
  $region1: #{tpu_custom_call.1} parent=0
    #allocation3 [shape = 'u8[8192]{0}', space=vmem, size = 0x2000, scoped, tag = 'output window, operand 0, single buffered']
    #allocation4 [shape = 's32[1]{0}', space=sflag, size = 0x4, scoped, tag = 'scoped memory for tpu_custom_call.1']
    %8 = vsyncpa [#allocation4], 0
    // Predicated region
    $region2: #{tpu_custom_call.1} parent=1 // pred_check
      _
    $region3: #{tpu_custom_call.1} parent=1 // pred_check_branch
      %10 = sbr.rel (0) target = $region5
    $region4: #{tpu_custom_call.1} parent=1 // pred_region
      _
    $region5: #{tpu_custom_call.1} parent=1 // pred_fallthru
      _
    // Predicated region
    $region6: #{tpu_custom_call.1} parent=1 // pred_check
      _
    $region7: #{tpu_custom_call.1} parent=1 // pred_check_branch
      %12 = sbr.rel (0) target = $region9
    $region8: #{tpu_custom_call.1} parent=1 // pred_region
      _
    $region9: #{tpu_custom_call.1} parent=1 // pred_fallthru
      _
    // Predicated region
    $region10: #{tpu_custom_call.1} parent=1 // pred_check
      _
    $region11: #{tpu_custom_call.1} parent=1 // pred_check_branch
      %14 = sbr.rel (0) target = $region13
    $region12: #{tpu_custom_call.1} parent=1 // pred_region
      _
    $region13: #{tpu_custom_call.1} parent=1 // pred_fallthru
      _
    %p16 = scmp.eq.s32.totalorder 0, 0
    // Predicated region
    $region14: #{tpu_custom_call.1} parent=1 // pred_check
      %p17 = pneg %p16
    $region15: #{tpu_custom_call.1} parent=1 // pred_check_branch
      %19 = sbr.rel (%p17) target = $region17
    $region16: #{tpu_custom_call.1} parent=1 // pred_region
      %vm20 = vcmask 261120
      %21 = vst.msk [vmem:[#allocation2] sm:$0xff] %vm20, 0.0
      %22 = vst.msk [vmem:[#allocation2 + $0x8] sm:$0xff] %vm20, 0.0
    $region17: #{tpu_custom_call.1} parent=1 // pred_fallthru
      _
    %v23 = vld [vmem:[%s0] sm:$0xf]
    %v24 = vld [vmem:[%s0 + $0x4] sm:$0xf]
    %v25 = vld [vmem:[%s1] sm:$0xf]
    %v26 = vld [vmem:[%s1 + $0x4] sm:$0xf]
    %v27 = vld [vmem:[%s1 + $0x8] sm:$0xf]
    %v28 = vld [vmem:[%s1 + $0xc] sm:$0xf]
    %v31 = vunpack.c.l.b16 %v23
    %v32 = vunpack.c.l.b16 %v24
    %v33 = vpack.c.b16 %v32, %v31
    %v38 = vunpack.c.l.b16 %v25
    %v39 = vunpack.c.l.b16 %v26
    %v40 = vunpack.c.l.b16 %v27
    %v41 = vunpack.c.l.b16 %v28
    %v42 = vpack.c.b16 %v39, %v38
    %v43 = vpack.c.b16 %v41, %v40
    %vm46 = vcmask 261120
    %v48 = vsel %vm46, %v33, 0
    %50 = vmatprep.subr.bf16.mxu0 0
    %51 = vmatpush1.bf16.msra.mxu0 %v42
    %52 = vmatprep.subr.bf16.mxu0 0
    %53 = vmatpush1.bf16.msra.mxu0 %v43
    %54 = vmatprep.subr.bf16.mxu0 0
    %55 = vmatpush1.bf16.msra.mxu0 0
    %56 = vmatprep.subr.bf16.mxu0 0
    %57 = vmatpush1.bf16.msra.mxu0 0
    %58 = vmatprep.subr.bf16.mxu0 0
    %59 = vmatpush1.bf16.msra.mxu0 0
    %60 = vmatprep.subr.bf16.mxu0 0
    %61 = vmatpush1.bf16.msra.mxu0 0
    %62 = vmatprep.subr.bf16.mxu0 0
    %63 = vmatpush1.bf16.msra.mxu0 0
    %64 = vmatprep.subr.bf16.mxu0 0
    %65 = vmatpush1.bf16.msra.mxu0 0
    %66 = vmatprep.subr.bf16.mxu0 0
    %67 = vmatpush1.bf16.msra.mxu0 0
    %68 = vmatprep.subr.bf16.mxu0 0
    %69 = vmatpush1.bf16.msra.mxu0 0
    %70 = vmatprep.subr.bf16.mxu0 0
    %71 = vmatpush1.bf16.msra.mxu0 0
    %72 = vmatprep.subr.bf16.mxu0 0
    %73 = vmatpush1.bf16.msra.mxu0 0
    %74 = vmatprep.subr.bf16.mxu0 0
    %75 = vmatpush1.bf16.msra.mxu0 0
    %76 = vmatprep.subr.bf16.mxu0 0
    %77 = vmatpush1.bf16.msra.mxu0 0
    %78 = vmatprep.subr.bf16.mxu0 0
    %79 = vmatpush1.bf16.msra.mxu0 0
    %80 = vmatprep.subr.bf16.mxu0 0
    %81 = vmatpush1.bf16.msra.mxu0 0
    %82 = vmatprep.mubr.bf16.mxu0 0
    %83 = vmatmul.mubr.bf16.gmra.mrb[0].mxu0 %v48
    %v84 = vpop.f32.mrb[0].mxu0
    %v85 = vadd.f32 0.0, %v84
    %v86 = vpop.f32.mrb[0].mxu0
    %v87 = vpop.f32.mrb[0].mxu0
    %v88 = vadd.f32 0.0, %v87
    %v89 = vpop.f32.mrb[0].mxu0
    %90 = vdwg.mxu0
    %v91 = vxor.u32 %v85, 2147483648
    %v92 = vxor.u32 %v88, 2147483648
    %v93 = vmul.f32 %v91, 1.442695
    %v94 = vpow.pop %v93
    %v95 = vmul.f32 %v92, 1.442695
    %v96 = vpow.pop %v95
    %v97 = vadd.f32 %v94, 1.0
    %v98 = vadd.f32 %v96, 1.0
    %v99 = vrcp.pop %v97
    %v100 = vmul.f32 1.0, %v99
    %v101 = vrcp.pop %v98
    %v102 = vmul.f32 1.0, %v101
    %v103 = vmul.f32 %v85, %v100
    %v104 = vmul.f32 %v88, %v102
    %107 = vrot.lane.b32.xlu0 %v85, 64
    %v108 = vpop.permute.xlu0 %107
    %109 = vrot.lane.b32.xlu0 %v88, 64
    %v110 = vpop.permute.xlu0 %109
    %v113 = vmul.f32 %v103, %v108
    %v114 = vmul.f32 %v104, %v110
    %v115 = vld [vmem:[#allocation2] sm:$0xff]
    %v116 = vld [vmem:[#allocation2 + $0x8] sm:$0xff]
    %v117 = vpack.c.bf16 %v114, %v113
    %v118 = vld [vmem:[%s2] sm:$0xf]
    %v119 = vld [vmem:[%s2 + $0x4] sm:$0xf]
    %v120 = vld [vmem:[%s2 + $0x8] sm:$0xf]
    %v121 = vld [vmem:[%s2 + $0xc] sm:$0xf]
    %v122 = vld [vmem:[%s2 + $0x10] sm:$0xf]
    %v123 = vld [vmem:[%s2 + $0x14] sm:$0xf]
    %v124 = vld [vmem:[%s2 + $0x18] sm:$0xf]
    %v125 = vld [vmem:[%s2 + $0x1c] sm:$0xf]
    %v134 = vunpack.c.l.b16 %v118
    %v135 = vunpack.c.l.b16 %v119
    %v136 = vunpack.c.l.b16 %v120
    %v137 = vunpack.c.l.b16 %v121
    %v138 = vunpack.c.l.b16 %v122
    %v139 = vunpack.c.l.b16 %v123
    %v140 = vunpack.c.l.b16 %v124
    %v141 = vunpack.c.l.b16 %v125
    %v142 = vpack.c.b16 %v135, %v134
    %v143 = vpack.c.b16 %v137, %v136
    %v144 = vpack.c.b16 %v139, %v138
    %v145 = vpack.c.b16 %v141, %v140
    %vm150 = vcmask 523264
    %v152 = vsel %vm150, %v117, 0
    %154 = vmatprep.subr.bf16.mxu0 0
    %155 = vmatpush1.bf16.msra.mxu0 %v142
    %156 = vmatprep.subr.bf16.mxu0 0
    %157 = vmatpush1.bf16.msra.mxu0 %v143
    %158 = vmatprep.subr.bf16.mxu0 0
    %159 = vmatpush1.bf16.msra.mxu0 %v144
    %160 = vmatprep.subr.bf16.mxu0 0
    %161 = vmatpush1.bf16.msra.mxu0 %v145
    %162 = vmatprep.subr.bf16.mxu0 0
    %163 = vmatpush1.bf16.msra.mxu0 0
    %164 = vmatprep.subr.bf16.mxu0 0
    %165 = vmatpush1.bf16.msra.mxu0 0
    %166 = vmatprep.subr.bf16.mxu0 0
    %167 = vmatpush1.bf16.msra.mxu0 0
    %168 = vmatprep.subr.bf16.mxu0 0
    %169 = vmatpush1.bf16.msra.mxu0 0
    %170 = vmatprep.subr.bf16.mxu0 0
    %171 = vmatpush1.bf16.msra.mxu0 0
    %172 = vmatprep.subr.bf16.mxu0 0
    %173 = vmatpush1.bf16.msra.mxu0 0
    %174 = vmatprep.subr.bf16.mxu0 0
    %175 = vmatpush1.bf16.msra.mxu0 0
    %176 = vmatprep.subr.bf16.mxu0 0
    %177 = vmatpush1.bf16.msra.mxu0 0
    %178 = vmatprep.subr.bf16.mxu0 0
    %179 = vmatpush1.bf16.msra.mxu0 0
    %180 = vmatprep.subr.bf16.mxu0 0
    %181 = vmatpush1.bf16.msra.mxu0 0
    %182 = vmatprep.subr.bf16.mxu0 0
    %183 = vmatpush1.bf16.msra.mxu0 0
    %184 = vmatprep.subr.bf16.mxu0 0
    %185 = vmatpush1.bf16.msra.mxu0 0
    %186 = vmatprep.mubr.bf16.mxu0 0
    %187 = vmatmul.mubr.bf16.gmra.mrb[0].mxu0 %v152
    %v188 = vpop.f32.mrb[0].mxu0
    %v189 = vadd.f32 0.0, %v188
    %v190 = vpop.f32.mrb[0].mxu0
    %v191 = vpop.f32.mrb[0].mxu0
    %v192 = vadd.f32 0.0, %v191
    %v193 = vpop.f32.mrb[0].mxu0
    %194 = vdwg.mxu0
    %v195 = vadd.f32 %v115, %v189
    %v196 = vadd.f32 %v116, %v192
    %197 = vst.msk [vmem:[#allocation2] sm:$0xff] %vm46, %v195
    %198 = vst.msk [vmem:[#allocation2 + $0x8] sm:$0xff] %vm46, %v196
    // Predicated region
    $region18: #{tpu_custom_call.1} parent=1 // pred_check
      %p199 = pneg %p16
    $region19: #{tpu_custom_call.1} parent=1 // pred_check_branch
      %201 = sbr.rel (%p199) target = $region21
    $region20: #{tpu_custom_call.1} parent=1 // pred_region
      %v202 = vld [vmem:[#allocation2] sm:$0xff]
      %v203 = vld [vmem:[#allocation2 + $0x8] sm:$0xff]
      %204 = vst.msk [vmem:[#allocation3] sm:$0xff] %vm46, %v202
      %205 = vst.msk [vmem:[#allocation3 + $0x8] sm:$0xff] %vm46, %v203
    $region21: #{tpu_custom_call.1} parent=1 // pred_fallthru
      _
    // Predicated region
    $region22: #{tpu_custom_call.1} parent=1 // pred_check
      _
    $region23: #{tpu_custom_call.1} parent=1 // pred_check_branch
      %207 = sbr.rel (0) target = $region25
    $region24: #{tpu_custom_call.1} parent=1 // pred_region
      %s209 = ssub.s32 256, 256
      %210 = vsyncadd [#allocation4], %s209
      %s211 = sshll.u32 [#allocation3], 4
      %s212 = int_to_ptr.vmem [resolvable:$true] %s211
      %217 = dma.vmem_to_hbm [thread:$0]  %s212, 256, %s3, [#allocation4], 128, 128, 8
    $region25: #{tpu_custom_call.1} parent=1 // pred_fallthru
      _
    // Predicated region
    $region26: #{tpu_custom_call.1} parent=1 // pred_check
      _
    $region27: #{tpu_custom_call.1} parent=1 // pred_check_branch
      %219 = sbr.rel (0) target = $region29
    $region28: #{tpu_custom_call.1} parent=1 // pred_region
      %220 = dma.done [#allocation4], 256
    $region29: #{tpu_custom_call.1} parent=1 // pred_fallthru
      _
    %221 = vsyncpa [#allocation4], 1

</llo_original>
